<compile_context>
chip_gen: v7x
topology: tpu7x:2x2x1
jax: 0.10.0
libtpu: 0.0.40
codegen_flags: <defaults>
</compile_context>

<pallas_src>
import jax
import jax.numpy as jnp
from jax.experimental import pallas as pl
from jax.experimental.pallas import tpu as pltpu


def _round_up(x: int, m: int) -> int:
    return (x + m - 1) // m * m


def lpu_kernel(xm_ref, xh_ref, w_ref, b_ref, o_ref):
    """Depthwise 3x3 conv tile (+bias; residual already folded into centre tap).

    xm_ref: (TH, W+2, TC)  zero-padded input rows [h*TH, h*TH+TH)
    xh_ref: (2,  W+2, TC)  the two padded rows directly below the tile
    w_ref : (3, 3, TC)     per-channel taps, f32, centre tap has +1 folded in
    b_ref : (1, 1, TC)     conv bias, f32
    o_ref : (TH, W, TC)    output tile
    """
    th, wp, _ = xm_ref.shape
    w_out = wp - 2

    w = w_ref[...]                       # (3,3,TC) f32
    b = b_ref[...]                       # (1,1,TC) f32
    xm = xm_ref[...]                     # native dtype -- no whole-tile upcast

    # ---- interior output rows [0, th-2): every tap lives inside xm ----------
    if th > 2:
        acc = b                                         # broadcasts on first add
        for kw in range(3):
            xw = xm[:, kw:kw + w_out, :]                # one sublane shift per kw
            acc = acc + (xw[0:th - 2] * w[0, kw]        # kh taps: leading-dim
                         + xw[1:th - 1] * w[1, kw]      #   slices (free offsets),
                         + xw[2:th] * w[2, kw])         #   promote-to-f32 in-reg
        o_ref[0:th - 2] = acc.astype(o_ref.dtype)

    # ---- bottom 2 rows: taps straight from xm tail + halo (no concat) -------
    xt = xm[th - 2:th]                   # (2, W+2, TC) leading-dim slice (free)
    xh = xh_ref[...]                     # (2, W+2, TC)
    t0 = b
    t1 = b
    for kw in range(3):
        a = xt[:, kw:kw + w_out, :]
        hh = xh[:, kw:kw + w_out, :]
        t0 = t0 + (a[0:1] * w[0, kw] + a[1:2] * w[1, kw] + hh[0:1] * w[2, kw])
        t1 = t1 + (a[1:2] * w[0, kw] + hh[0:1] * w[1, kw] + hh[1:2] * w[2, kw])
    o_ref[th - 2:th - 1] = t0.astype(o_ref.dtype)
    o_ref[th - 1:th] = t1.astype(o_ref.dtype)


def local_perception_unit(x_nchw, weight, bias, *, tile_h=None):
    """x_nchw: (B, C, H, W); weight: (C, 1, 3, 3) depthwise; bias: (C,). Returns NCHW."""
    B, C, H, W = x_nchw.shape
    itemsize = jnp.dtype(x_nchw.dtype).itemsize
    LANE = 128

    # ---- channel tiling: lane-dense only when the extra HBM traffic is cheap --
    c_up = _round_up(C, LANE)
    if C % LANE == 0:
        Cp = C
    elif C > LANE and (c_up - C) * 4 <= C:      # <= ~25% extra HBM traffic
        Cp = c_up
    else:
        Cp = C   # small/awkward C: keep true extent (see TODO(synk) above)
    tc = LANE if (Cp % LANE == 0 and Cp >= LANE) else Cp
    n_c = Cp // tc

    # ---- generation-aware block-size target + VMEM capacity -------------------
    try:
        vmem_cap = int(getattr(pltpu.get_tpu_info(), "vmem_capacity_bytes", 64 << 20))
    except Exception:
        vmem_cap = 64 << 20                      # conservative fallback
    # ~1.5 MiB input blocks on 128-MiB-VMEM parts (v5e/v6e); ~512 KiB on v7x.
    blk_target = (3 << 19) if vmem_cap >= (100 << 20) else (1 << 19)

    # ---- H tiling (1-row halo between tiles via a 2-row halo BlockSpec) -------
    if tile_h is None:
        row_bytes = (W + 2) * tc * itemsize
        th_auto = blk_target // max(row_bytes, 1)
        th_auto = max(4, min((th_auto // 2) * 2, _round_up(H, 4)))
        # keep >= 2 grid blocks so both v7x TensorCores have work even at B == 1
        if B * n_c * pl.cdiv(H, th_auto) < 2 and H >= 8:
            th_auto = _round_up(pl.cdiv(H, 2), 2)
        tile_h = th_auto
    assert tile_h >= 2 and tile_h % 2 == 0, "tile_h must be a positive even int"
    th = tile_h
    Hp = _round_up(H, th)
    n_h = Hp // th

    # ---- layout + single fused pad (spatial halo + H round-up + channel pad) --
    # TODO(synk): these transposes + the pad are extra full-tensor HBM passes;
    # keep the model NHWC end-to-end and mask edges in-kernel to drop them.
    x_nhwc = jnp.transpose(x_nchw, (0, 2, 3, 1))                       # (B,H,W,C)
    x_pad = jnp.pad(
        x_nhwc, ((0, 0), (1, 1 + Hp - H), (1, 1), (0, Cp - C)))        # (B,Hp+2,W+2,Cp)

    w_hwc = jnp.transpose(weight[:, 0, :, :], (1, 2, 0)).astype(jnp.float32)
    w_hwc = w_hwc.at[1, 1, :].add(1.0)          # fold residual (+x) into centre tap
    w_adj = jnp.pad(w_hwc, ((0, 0), (0, 0), (0, Cp - C)))              # (3,3,Cp)
    b_pad = jnp.pad(bias.astype(jnp.float32), (0, Cp - C)).reshape(1, 1, Cp)

    # ---- VMEM budget: double-buffered blocks + in-kernel temporaries ----------
    blk_in = th * (W + 2) * tc * itemsize
    blk_halo = 2 * (W + 2) * tc * itemsize
    blk_out = th * W * tc * itemsize
    blk_par = (9 + 1) * tc * 4
    tmps = (blk_in                              # xm value
            + 3 * th * W * tc * itemsize        # per-kw shifted slices (native dtype)
            + 3 * th * W * tc * 4)              # f32 accumulator + live products
    est = 2 * (blk_in + blk_halo + blk_out + blk_par) + tmps
    vmem_limit = int(min(max(est + (8 << 20), 32 << 20), (vmem_cap * 3) // 4))

    out_full = pl.pallas_call(
        lpu_kernel,
        out_shape=jax.ShapeDtypeStruct((B, Hp, W, Cp), x_nchw.dtype),
        grid_spec=pltpu.PrefetchScalarGridSpec(
            num_scalar_prefetch=0,
            # h fastest-varying: weight/bias blocks stay resident across steps
            # and consecutive steps walk contiguous rows of one channel slab.
            grid=(B, n_c, n_h),
            in_specs=[
                # main TH rows of the padded input
                pl.BlockSpec((pl.Squeezed(), th, W + 2, tc),
                             lambda b, c, h: (b, h, 0, c)),
                # 2 halo rows just below the tile: block size 2 along H, so block
                # index (h+1)*th/2 starts exactly at padded row h*th + th.
                pl.BlockSpec((pl.Squeezed(), 2, W + 2, tc),
                             lambda b, c, h: (b, (h + 1) * (th // 2), 0, c)),
                pl.BlockSpec((3, 3, tc), lambda b, c, h: (0, 0, c)),
                pl.BlockSpec((1, 1, tc), lambda b, c, h: (0, 0, c)),
            ],
            out_specs=pl.BlockSpec((pl.Squeezed(), th, W, tc),
                                   lambda b, c, h: (b, h, 0, c)),
        ),
        compiler_params=pltpu.CompilerParams(
            dimension_semantics=("parallel", "parallel", "parallel"),
            vmem_limit_bytes=vmem_limit),
    )(x_pad, x_pad, w_adj, b_pad)

    out = out_full[:, :H, :, :C]                 # drop H / channel padding
    return jnp.transpose(out, (0, 3, 1, 2))      # back to NCHW (module API)


def _reference(x_nchw, weight, bias):
    C = x_nchw.shape[1]
    conv = jax.lax.conv_general_dilated(
        x_nchw, weight,
        window_strides=(1, 1), padding=((1, 1), (1, 1)),
        dimension_numbers=("NCHW", "OIHW", "NCHW"),
        feature_group_count=C)
    return x_nchw + conv + bias.reshape(1, C, 1, 1)


if __name__ == "__main__":
    key = jax.random.PRNGKey(0)
    k1, k2, k3, k4, k5, k6 = jax.random.split(key, 6)

    # Test 1: module-scale shapes; explicit tile_h=8 so the interior H-tile halo
    # path is actually exercised (grid = (2, 1, 2)).
    B, C, H, W = 2, 4, 16, 16
    x = jax.random.normal(k1, (B, C, H, W), dtype=jnp.float32)
    weight = jax.random.normal(k2, (C, 1, 3, 3), dtype=jnp.float32) * 0.1
    bias = jax.random.normal(k3, (C,), dtype=jnp.float32) * 0.1

    out = jax.block_until_ready(local_perception_unit(x, weight, bias, tile_h=8))
    ref = _reference(x, weight, bias)
    assert out.shape == (B, C, H, W)
    assert jnp.allclose(out, ref, atol=1e-5, rtol=1e-5)

    # Test 2: lane-dense channel count (C % 128 == 0) -> channel-tiled grid
    # with auto-picked H tiles.
    B2, C2, H2, W2 = 1, 256, 8, 8
    x2 = jax.random.normal(k4, (B2, C2, H2, W2), dtype=jnp.float32)
    w2 = jax.random.normal(k5, (C2, 1, 3, 3), dtype=jnp.float32) * 0.1
    b2 = jax.random.normal(k6, (C2,), dtype=jnp.float32) * 0.1

    out2 = jax.block_until_ready(local_perception_unit(x2, w2, b2))
    ref2 = _reference(x2, w2, b2)
    assert out2.shape == (B2, C2, H2, W2)
    assert jnp.allclose(out2, ref2, atol=1e-5, rtol=1e-5)

    print("KERNEL_OK")
</pallas_src>

<mosaic_0001>
module attributes {stable_mosaic.version = 11 : i64} {
  func.func @lpu_kernel(%arg0: i32, %arg1: i32, %arg2: i32, %arg3: memref<1x8x18x4xf32, #tpu.memory_space<vmem>>, %arg4: memref<1x2x18x4xf32, #tpu.memory_space<vmem>>, %arg5: memref<3x3x4xf32, #tpu.memory_space<vmem>>, %arg6: memref<1x1x4xf32, #tpu.memory_space<vmem>>, %arg7: memref<1x8x16x4xf32, #tpu.memory_space<vmem>>) attributes {dimension_semantics = [#tpu.dimension_semantics<parallel>, #tpu.dimension_semantics<parallel>, #tpu.dimension_semantics<parallel>], iteration_bounds = array<i64: 2, 1, 2>, scalar_prefetch = 0 : i64, scratch_operands = 0 : i64, tpu.core_type = #tpu.core_type<tc>, window_params = [{transform_indices = @transform_0, window_bounds = array<i64: 1, 8, 18, 4>}, {transform_indices = @transform_1, window_bounds = array<i64: 1, 2, 18, 4>}, {transform_indices = @transform_2, window_bounds = array<i64: 3, 3, 4>}, {transform_indices = @transform_3, window_bounds = array<i64: 1, 1, 4>}, {transform_indices = @transform_4, window_bounds = array<i64: 1, 8, 16, 4>}]} {
    %c0 = arith.constant 0 : index
    %c0_0 = arith.constant 0 : index
    %c0_1 = arith.constant 0 : index
    %0 = vector.load %arg5[%c0, %c0_0, %c0_1] : memref<3x3x4xf32, #tpu.memory_space<vmem>>, vector<3x3x4xf32>
    %c0_2 = arith.constant 0 : index
    %c0_3 = arith.constant 0 : index
    %c0_4 = arith.constant 0 : index
    %1 = vector.load %arg6[%c0_2, %c0_3, %c0_4] : memref<1x1x4xf32, #tpu.memory_space<vmem>>, vector<1x1x4xf32>
    %c0_5 = arith.constant 0 : index
    %c0_6 = arith.constant 0 : index
    %c0_7 = arith.constant 0 : index
    %c0_8 = arith.constant 0 : index
    %2 = vector.load %arg3[%c0_5, %c0_6, %c0_7, %c0_8] : memref<1x8x18x4xf32, #tpu.memory_space<vmem>>, vector<1x8x18x4xf32>
    %3 = vector.shape_cast %2 : vector<1x8x18x4xf32> to vector<8x18x4xf32>
    %4 = vector.extract_strided_slice %3 {offsets = [0, 0, 0], sizes = [8, 16, 4], strides = [1, 1, 1]} : vector<8x18x4xf32> to vector<8x16x4xf32>
    %5 = vector.extract_strided_slice %4 {offsets = [0, 0, 0], sizes = [6, 16, 4], strides = [1, 1, 1]} : vector<8x16x4xf32> to vector<6x16x4xf32>
    %6 = vector.extract_strided_slice %0 {offsets = [0, 0, 0], sizes = [1, 1, 4], strides = [1, 1, 1]} : vector<3x3x4xf32> to vector<1x1x4xf32>
    %7 = vector.shape_cast %6 : vector<1x1x4xf32> to vector<4xf32>
    %8 = vector.shape_cast %7 : vector<4xf32> to vector<1x1x4xf32>
    %9 = vector.broadcast %8 : vector<1x1x4xf32> to vector<6x16x4xf32>
    %10 = arith.mulf %5, %9 : vector<6x16x4xf32>
    %11 = vector.extract_strided_slice %4 {offsets = [1, 0, 0], sizes = [6, 16, 4], strides = [1, 1, 1]} : vector<8x16x4xf32> to vector<6x16x4xf32>
    %12 = vector.extract_strided_slice %0 {offsets = [1, 0, 0], sizes = [1, 1, 4], strides = [1, 1, 1]} : vector<3x3x4xf32> to vector<1x1x4xf32>
    %13 = vector.shape_cast %12 : vector<1x1x4xf32> to vector<4xf32>
    %14 = vector.shape_cast %13 : vector<4xf32> to vector<1x1x4xf32>
    %15 = vector.broadcast %14 : vector<1x1x4xf32> to vector<6x16x4xf32>
    %16 = arith.mulf %11, %15 : vector<6x16x4xf32>
    %17 = arith.addf %10, %16 : vector<6x16x4xf32>
    %18 = vector.extract_strided_slice %4 {offsets = [2, 0, 0], sizes = [6, 16, 4], strides = [1, 1, 1]} : vector<8x16x4xf32> to vector<6x16x4xf32>
    %19 = vector.extract_strided_slice %0 {offsets = [2, 0, 0], sizes = [1, 1, 4], strides = [1, 1, 1]} : vector<3x3x4xf32> to vector<1x1x4xf32>
    %20 = vector.shape_cast %19 : vector<1x1x4xf32> to vector<4xf32>
    %21 = vector.shape_cast %20 : vector<4xf32> to vector<1x1x4xf32>
    %22 = vector.broadcast %21 : vector<1x1x4xf32> to vector<6x16x4xf32>
    %23 = arith.mulf %18, %22 : vector<6x16x4xf32>
    %24 = arith.addf %17, %23 : vector<6x16x4xf32>
    %25 = vector.broadcast %1 : vector<1x1x4xf32> to vector<6x16x4xf32>
    %26 = arith.addf %25, %24 : vector<6x16x4xf32>
    %27 = vector.extract_strided_slice %3 {offsets = [0, 1, 0], sizes = [8, 16, 4], strides = [1, 1, 1]} : vector<8x18x4xf32> to vector<8x16x4xf32>
    %28 = vector.extract_strided_slice %27 {offsets = [0, 0, 0], sizes = [6, 16, 4], strides = [1, 1, 1]} : vector<8x16x4xf32> to vector<6x16x4xf32>
    %29 = vector.extract_strided_slice %0 {offsets = [0, 1, 0], sizes = [1, 1, 4], strides = [1, 1, 1]} : vector<3x3x4xf32> to vector<1x1x4xf32>
    %30 = vector.shape_cast %29 : vector<1x1x4xf32> to vector<4xf32>
    %31 = vector.shape_cast %30 : vector<4xf32> to vector<1x1x4xf32>
    %32 = vector.broadcast %31 : vector<1x1x4xf32> to vector<6x16x4xf32>
    %33 = arith.mulf %28, %32 : vector<6x16x4xf32>
    %34 = vector.extract_strided_slice %27 {offsets = [1, 0, 0], sizes = [6, 16, 4], strides = [1, 1, 1]} : vector<8x16x4xf32> to vector<6x16x4xf32>
    %35 = vector.extract_strided_slice %0 {offsets = [1, 1, 0], sizes = [1, 1, 4], strides = [1, 1, 1]} : vector<3x3x4xf32> to vector<1x1x4xf32>
    %36 = vector.shape_cast %35 : vector<1x1x4xf32> to vector<4xf32>
    %37 = vector.shape_cast %36 : vector<4xf32> to vector<1x1x4xf32>
    %38 = vector.broadcast %37 : vector<1x1x4xf32> to vector<6x16x4xf32>
    %39 = arith.mulf %34, %38 : vector<6x16x4xf32>
    %40 = arith.addf %33, %39 : vector<6x16x4xf32>
    %41 = vector.extract_strided_slice %27 {offsets = [2, 0, 0], sizes = [6, 16, 4], strides = [1, 1, 1]} : vector<8x16x4xf32> to vector<6x16x4xf32>
    %42 = vector.extract_strided_slice %0 {offsets = [2, 1, 0], sizes = [1, 1, 4], strides = [1, 1, 1]} : vector<3x3x4xf32> to vector<1x1x4xf32>
    %43 = vector.shape_cast %42 : vector<1x1x4xf32> to vector<4xf32>
    %44 = vector.shape_cast %43 : vector<4xf32> to vector<1x1x4xf32>
    %45 = vector.broadcast %44 : vector<1x1x4xf32> to vector<6x16x4xf32>
    %46 = arith.mulf %41, %45 : vector<6x16x4xf32>
    %47 = arith.addf %40, %46 : vector<6x16x4xf32>
    %48 = arith.addf %26, %47 : vector<6x16x4xf32>
    %49 = vector.extract_strided_slice %3 {offsets = [0, 2, 0], sizes = [8, 16, 4], strides = [1, 1, 1]} : vector<8x18x4xf32> to vector<8x16x4xf32>
    %50 = vector.extract_strided_slice %49 {offsets = [0, 0, 0], sizes = [6, 16, 4], strides = [1, 1, 1]} : vector<8x16x4xf32> to vector<6x16x4xf32>
    %51 = vector.extract_strided_slice %0 {offsets = [0, 2, 0], sizes = [1, 1, 4], strides = [1, 1, 1]} : vector<3x3x4xf32> to vector<1x1x4xf32>
    %52 = vector.shape_cast %51 : vector<1x1x4xf32> to vector<4xf32>
    %53 = vector.shape_cast %52 : vector<4xf32> to vector<1x1x4xf32>
    %54 = vector.broadcast %53 : vector<1x1x4xf32> to vector<6x16x4xf32>
    %55 = arith.mulf %50, %54 : vector<6x16x4xf32>
    %56 = vector.extract_strided_slice %49 {offsets = [1, 0, 0], sizes = [6, 16, 4], strides = [1, 1, 1]} : vector<8x16x4xf32> to vector<6x16x4xf32>
    %57 = vector.extract_strided_slice %0 {offsets = [1, 2, 0], sizes = [1, 1, 4], strides = [1, 1, 1]} : vector<3x3x4xf32> to vector<1x1x4xf32>
    %58 = vector.shape_cast %57 : vector<1x1x4xf32> to vector<4xf32>
    %59 = vector.shape_cast %58 : vector<4xf32> to vector<1x1x4xf32>
    %60 = vector.broadcast %59 : vector<1x1x4xf32> to vector<6x16x4xf32>
    %61 = arith.mulf %56, %60 : vector<6x16x4xf32>
    %62 = arith.addf %55, %61 : vector<6x16x4xf32>
    %63 = vector.extract_strided_slice %49 {offsets = [2, 0, 0], sizes = [6, 16, 4], strides = [1, 1, 1]} : vector<8x16x4xf32> to vector<6x16x4xf32>
    %64 = vector.extract_strided_slice %0 {offsets = [2, 2, 0], sizes = [1, 1, 4], strides = [1, 1, 1]} : vector<3x3x4xf32> to vector<1x1x4xf32>
    %65 = vector.shape_cast %64 : vector<1x1x4xf32> to vector<4xf32>
    %66 = vector.shape_cast %65 : vector<4xf32> to vector<1x1x4xf32>
    %67 = vector.broadcast %66 : vector<1x1x4xf32> to vector<6x16x4xf32>
    %68 = arith.mulf %63, %67 : vector<6x16x4xf32>
    %69 = arith.addf %62, %68 : vector<6x16x4xf32>
    %70 = arith.addf %48, %69 : vector<6x16x4xf32>
    %c0_9 = arith.constant 0 : index
    %c0_10 = arith.constant 0 : index
    %c0_11 = arith.constant 0 : index
    %c0_12 = arith.constant 0 : index
    %71 = vector.load %arg7[%c0_9, %c0_10, %c0_11, %c0_12] : memref<1x8x16x4xf32, #tpu.memory_space<vmem>>, vector<1x6x16x4xf32>
    %72 = vector.shape_cast %71 : vector<1x6x16x4xf32> to vector<6x16x4xf32>
    %73 = vector.shape_cast %70 : vector<6x16x4xf32> to vector<1x6x16x4xf32>
    tpu.vector_store %arg7[%c0_9, %c0_10, %c0_11, %c0_12], %73 {strides = array<i32>} : memref<1x8x16x4xf32, #tpu.memory_space<vmem>>, vector<1x6x16x4xf32>,
    %74 = vector.extract_strided_slice %3 {offsets = [6, 0, 0], sizes = [2, 18, 4], strides = [1, 1, 1]} : vector<8x18x4xf32> to vector<2x18x4xf32>
    %c0_13 = arith.constant 0 : index
    %c0_14 = arith.constant 0 : index
    %c0_15 = arith.constant 0 : index
    %c0_16 = arith.constant 0 : index
    %75 = vector.load %arg4[%c0_13, %c0_14, %c0_15, %c0_16] : memref<1x2x18x4xf32, #tpu.memory_space<vmem>>, vector<1x2x18x4xf32>
    %76 = vector.shape_cast %75 : vector<1x2x18x4xf32> to vector<2x18x4xf32>
    %77 = vector.extract_strided_slice %74 {offsets = [0, 0, 0], sizes = [2, 16, 4], strides = [1, 1, 1]} : vector<2x18x4xf32> to vector<2x16x4xf32>
    %78 = vector.extract_strided_slice %76 {offsets = [0, 0, 0], sizes = [2, 16, 4], strides = [1, 1, 1]} : vector<2x18x4xf32> to vector<2x16x4xf32>
    %79 = vector.extract_strided_slice %77 {offsets = [0, 0, 0], sizes = [1, 16, 4], strides = [1, 1, 1]} : vector<2x16x4xf32> to vector<1x16x4xf32>
    %80 = vector.extract_strided_slice %0 {offsets = [0, 0, 0], sizes = [1, 1, 4], strides = [1, 1, 1]} : vector<3x3x4xf32> to vector<1x1x4xf32>
    %81 = vector.shape_cast %80 : vector<1x1x4xf32> to vector<4xf32>
    %82 = vector.shape_cast %81 : vector<4xf32> to vector<1x1x4xf32>
    %83 = vector.broadcast %82 : vector<1x1x4xf32> to vector<1x16x4xf32>
    %84 = arith.mulf %79, %83 : vector<1x16x4xf32>
    %85 = vector.extract_strided_slice %77 {offsets = [1, 0, 0], sizes = [1, 16, 4], strides = [1, 1, 1]} : vector<2x16x4xf32> to vector<1x16x4xf32>
    %86 = vector.extract_strided_slice %0 {offsets = [1, 0, 0], sizes = [1, 1, 4], strides = [1, 1, 1]} : vector<3x3x4xf32> to vector<1x1x4xf32>
    %87 = vector.shape_cast %86 : vector<1x1x4xf32> to vector<4xf32>
    %88 = vector.shape_cast %87 : vector<4xf32> to vector<1x1x4xf32>
    %89 = vector.broadcast %88 : vector<1x1x4xf32> to vector<1x16x4xf32>
    %90 = arith.mulf %85, %89 : vector<1x16x4xf32>
    %91 = arith.addf %84, %90 : vector<1x16x4xf32>
    %92 = vector.extract_strided_slice %78 {offsets = [0, 0, 0], sizes = [1, 16, 4], strides = [1, 1, 1]} : vector<2x16x4xf32> to vector<1x16x4xf32>
    %93 = vector.extract_strided_slice %0 {offsets = [2, 0, 0], sizes = [1, 1, 4], strides = [1, 1, 1]} : vector<3x3x4xf32> to vector<1x1x4xf32>
    %94 = vector.shape_cast %93 : vector<1x1x4xf32> to vector<4xf32>
    %95 = vector.shape_cast %94 : vector<4xf32> to vector<1x1x4xf32>
    %96 = vector.broadcast %95 : vector<1x1x4xf32> to vector<1x16x4xf32>
    %97 = arith.mulf %92, %96 : vector<1x16x4xf32>
    %98 = arith.addf %91, %97 : vector<1x16x4xf32>
    %99 = vector.broadcast %1 : vector<1x1x4xf32> to vector<1x16x4xf32>
    %100 = arith.addf %99, %98 : vector<1x16x4xf32>
    %101 = vector.extract_strided_slice %77 {offsets = [1, 0, 0], sizes = [1, 16, 4], strides = [1, 1, 1]} : vector<2x16x4xf32> to vector<1x16x4xf32>
    %102 = vector.extract_strided_slice %0 {offsets = [0, 0, 0], sizes = [1, 1, 4], strides = [1, 1, 1]} : vector<3x3x4xf32> to vector<1x1x4xf32>
    %103 = vector.shape_cast %102 : vector<1x1x4xf32> to vector<4xf32>
    %104 = vector.shape_cast %103 : vector<4xf32> to vector<1x1x4xf32>
    %105 = vector.broadcast %104 : vector<1x1x4xf32> to vector<1x16x4xf32>
    %106 = arith.mulf %101, %105 : vector<1x16x4xf32>
    %107 = vector.extract_strided_slice %78 {offsets = [0, 0, 0], sizes = [1, 16, 4], strides = [1, 1, 1]} : vector<2x16x4xf32> to vector<1x16x4xf32>
    %108 = vector.extract_strided_slice %0 {offsets = [1, 0, 0], sizes = [1, 1, 4], strides = [1, 1, 1]} : vector<3x3x4xf32> to vector<1x1x4xf32>
    %109 = vector.shape_cast %108 : vector<1x1x4xf32> to vector<4xf32>
    %110 = vector.shape_cast %109 : vector<4xf32> to vector<1x1x4xf32>
    %111 = vector.broadcast %110 : vector<1x1x4xf32> to vector<1x16x4xf32>
    %112 = arith.mulf %107, %111 : vector<1x16x4xf32>
    %113 = arith.addf %106, %112 : vector<1x16x4xf32>
    %114 = vector.extract_strided_slice %78 {offsets = [1, 0, 0], sizes = [1, 16, 4], strides = [1, 1, 1]} : vector<2x16x4xf32> to vector<1x16x4xf32>
    %115 = vector.extract_strided_slice %0 {offsets = [2, 0, 0], sizes = [1, 1, 4], strides = [1, 1, 1]} : vector<3x3x4xf32> to vector<1x1x4xf32>
    %116 = vector.shape_cast %115 : vector<1x1x4xf32> to vector<4xf32>
    %117 = vector.shape_cast %116 : vector<4xf32> to vector<1x1x4xf32>
    %118 = vector.broadcast %117 : vector<1x1x4xf32> to vector<1x16x4xf32>
    %119 = arith.mulf %114, %118 : vector<1x16x4xf32>
    %120 = arith.addf %113, %119 : vector<1x16x4xf32>
    %121 = vector.broadcast %1 : vector<1x1x4xf32> to vector<1x16x4xf32>
    %122 = arith.addf %121, %120 : vector<1x16x4xf32>
    %123 = vector.extract_strided_slice %74 {offsets = [0, 1, 0], sizes = [2, 16, 4], strides = [1, 1, 1]} : vector<2x18x4xf32> to vector<2x16x4xf32>
    %124 = vector.extract_strided_slice %76 {offsets = [0, 1, 0], sizes = [2, 16, 4], strides = [1, 1, 1]} : vector<2x18x4xf32> to vector<2x16x4xf32>
    %125 = vector.extract_strided_slice %123 {offsets = [0, 0, 0], sizes = [1, 16, 4], strides = [1, 1, 1]} : vector<2x16x4xf32> to vector<1x16x4xf32>
    %126 = vector.extract_strided_slice %0 {offsets = [0, 1, 0], sizes = [1, 1, 4], strides = [1, 1, 1]} : vector<3x3x4xf32> to vector<1x1x4xf32>
    %127 = vector.shape_cast %126 : vector<1x1x4xf32> to vector<4xf32>
    %128 = vector.shape_cast %127 : vector<4xf32> to vector<1x1x4xf32>
    %129 = vector.broadcast %128 : vector<1x1x4xf32> to vector<1x16x4xf32>
    %130 = arith.mulf %125, %129 : vector<1x16x4xf32>
    %131 = vector.extract_strided_slice %123 {offsets = [1, 0, 0], sizes = [1, 16, 4], strides = [1, 1, 1]} : vector<2x16x4xf32> to vector<1x16x4xf32>
    %132 = vector.extract_strided_slice %0 {offsets = [1, 1, 0], sizes = [1, 1, 4], strides = [1, 1, 1]} : vector<3x3x4xf32> to vector<1x1x4xf32>
    %133 = vector.shape_cast %132 : vector<1x1x4xf32> to vector<4xf32>
    %134 = vector.shape_cast %133 : vector<4xf32> to vector<1x1x4xf32>
    %135 = vector.broadcast %134 : vector<1x1x4xf32> to vector<1x16x4xf32>
    %136 = arith.mulf %131, %135 : vector<1x16x4xf32>
    %137 = arith.addf %130, %136 : vector<1x16x4xf32>
    %138 = vector.extract_strided_slice %124 {offsets = [0, 0, 0], sizes = [1, 16, 4], strides = [1, 1, 1]} : vector<2x16x4xf32> to vector<1x16x4xf32>
    %139 = vector.extract_strided_slice %0 {offsets = [2, 1, 0], sizes = [1, 1, 4], strides = [1, 1, 1]} : vector<3x3x4xf32> to vector<1x1x4xf32>
    %140 = vector.shape_cast %139 : vector<1x1x4xf32> to vector<4xf32>
    %141 = vector.shape_cast %140 : vector<4xf32> to vector<1x1x4xf32>
    %142 = vector.broadcast %141 : vector<1x1x4xf32> to vector<1x16x4xf32>
    %143 = arith.mulf %138, %142 : vector<1x16x4xf32>
    %144 = arith.addf %137, %143 : vector<1x16x4xf32>
    %145 = arith.addf %100, %144 : vector<1x16x4xf32>
    %146 = vector.extract_strided_slice %123 {offsets = [1, 0, 0], sizes = [1, 16, 4], strides = [1, 1, 1]} : vector<2x16x4xf32> to vector<1x16x4xf32>
    %147 = vector.extract_strided_slice %0 {offsets = [0, 1, 0], sizes = [1, 1, 4], strides = [1, 1, 1]} : vector<3x3x4xf32> to vector<1x1x4xf32>
    %148 = vector.shape_cast %147 : vector<1x1x4xf32> to vector<4xf32>
    %149 = vector.shape_cast %148 : vector<4xf32> to vector<1x1x4xf32>
    %150 = vector.broadcast %149 : vector<1x1x4xf32> to vector<1x16x4xf32>
    %151 = arith.mulf %146, %150 : vector<1x16x4xf32>
    %152 = vector.extract_strided_slice %124 {offsets = [0, 0, 0], sizes = [1, 16, 4], strides = [1, 1, 1]} : vector<2x16x4xf32> to vector<1x16x4xf32>
    %153 = vector.extract_strided_slice %0 {offsets = [1, 1, 0], sizes = [1, 1, 4], strides = [1, 1, 1]} : vector<3x3x4xf32> to vector<1x1x4xf32>
    %154 = vector.shape_cast %153 : vector<1x1x4xf32> to vector<4xf32>
    %155 = vector.shape_cast %154 : vector<4xf32> to vector<1x1x4xf32>
    %156 = vector.broadcast %155 : vector<1x1x4xf32> to vector<1x16x4xf32>
    %157 = arith.mulf %152, %156 : vector<1x16x4xf32>
    %158 = arith.addf %151, %157 : vector<1x16x4xf32>
    %159 = vector.extract_strided_slice %124 {offsets = [1, 0, 0], sizes = [1, 16, 4], strides = [1, 1, 1]} : vector<2x16x4xf32> to vector<1x16x4xf32>
    %160 = vector.extract_strided_slice %0 {offsets = [2, 1, 0], sizes = [1, 1, 4], strides = [1, 1, 1]} : vector<3x3x4xf32> to vector<1x1x4xf32>
    %161 = vector.shape_cast %160 : vector<1x1x4xf32> to vector<4xf32>
    %162 = vector.shape_cast %161 : vector<4xf32> to vector<1x1x4xf32>
    %163 = vector.broadcast %162 : vector<1x1x4xf32> to vector<1x16x4xf32>
    %164 = arith.mulf %159, %163 : vector<1x16x4xf32>
    %165 = arith.addf %158, %164 : vector<1x16x4xf32>
    %166 = arith.addf %122, %165 : vector<1x16x4xf32>
    %167 = vector.extract_strided_slice %74 {offsets = [0, 2, 0], sizes = [2, 16, 4], strides = [1, 1, 1]} : vector<2x18x4xf32> to vector<2x16x4xf32>
    %168 = vector.extract_strided_slice %76 {offsets = [0, 2, 0], sizes = [2, 16, 4], strides = [1, 1, 1]} : vector<2x18x4xf32> to vector<2x16x4xf32>
    %169 = vector.extract_strided_slice %167 {offsets = [0, 0, 0], sizes = [1, 16, 4], strides = [1, 1, 1]} : vector<2x16x4xf32> to vector<1x16x4xf32>
    %170 = vector.extract_strided_slice %0 {offsets = [0, 2, 0], sizes = [1, 1, 4], strides = [1, 1, 1]} : vector<3x3x4xf32> to vector<1x1x4xf32>
    %171 = vector.shape_cast %170 : vector<1x1x4xf32> to vector<4xf32>
    %172 = vector.shape_cast %171 : vector<4xf32> to vector<1x1x4xf32>
    %173 = vector.broadcast %172 : vector<1x1x4xf32> to vector<1x16x4xf32>
    %174 = arith.mulf %169, %173 : vector<1x16x4xf32>
    %175 = vector.extract_strided_slice %167 {offsets = [1, 0, 0], sizes = [1, 16, 4], strides = [1, 1, 1]} : vector<2x16x4xf32> to vector<1x16x4xf32>
    %176 = vector.extract_strided_slice %0 {offsets = [1, 2, 0], sizes = [1, 1, 4], strides = [1, 1, 1]} : vector<3x3x4xf32> to vector<1x1x4xf32>
    %177 = vector.shape_cast %176 : vector<1x1x4xf32> to vector<4xf32>
    %178 = vector.shape_cast %177 : vector<4xf32> to vector<1x1x4xf32>
    %179 = vector.broadcast %178 : vector<1x1x4xf32> to vector<1x16x4xf32>
    %180 = arith.mulf %175, %179 : vector<1x16x4xf32>
    %181 = arith.addf %174, %180 : vector<1x16x4xf32>
    %182 = vector.extract_strided_slice %168 {offsets = [0, 0, 0], sizes = [1, 16, 4], strides = [1, 1, 1]} : vector<2x16x4xf32> to vector<1x16x4xf32>
    %183 = vector.extract_strided_slice %0 {offsets = [2, 2, 0], sizes = [1, 1, 4], strides = [1, 1, 1]} : vector<3x3x4xf32> to vector<1x1x4xf32>
    %184 = vector.shape_cast %183 : vector<1x1x4xf32> to vector<4xf32>
    %185 = vector.shape_cast %184 : vector<4xf32> to vector<1x1x4xf32>
    %186 = vector.broadcast %185 : vector<1x1x4xf32> to vector<1x16x4xf32>
    %187 = arith.mulf %182, %186 : vector<1x16x4xf32>
    %188 = arith.addf %181, %187 : vector<1x16x4xf32>
    %189 = arith.addf %145, %188 : vector<1x16x4xf32>
    %190 = vector.extract_strided_slice %167 {offsets = [1, 0, 0], sizes = [1, 16, 4], strides = [1, 1, 1]} : vector<2x16x4xf32> to vector<1x16x4xf32>
    %191 = vector.extract_strided_slice %0 {offsets = [0, 2, 0], sizes = [1, 1, 4], strides = [1, 1, 1]} : vector<3x3x4xf32> to vector<1x1x4xf32>
    %192 = vector.shape_cast %191 : vector<1x1x4xf32> to vector<4xf32>
    %193 = vector.shape_cast %192 : vector<4xf32> to vector<1x1x4xf32>
    %194 = vector.broadcast %193 : vector<1x1x4xf32> to vector<1x16x4xf32>
    %195 = arith.mulf %190, %194 : vector<1x16x4xf32>
    %196 = vector.extract_strided_slice %168 {offsets = [0, 0, 0], sizes = [1, 16, 4], strides = [1, 1, 1]} : vector<2x16x4xf32> to vector<1x16x4xf32>
    %197 = vector.extract_strided_slice %0 {offsets = [1, 2, 0], sizes = [1, 1, 4], strides = [1, 1, 1]} : vector<3x3x4xf32> to vector<1x1x4xf32>
    %198 = vector.shape_cast %197 : vector<1x1x4xf32> to vector<4xf32>
    %199 = vector.shape_cast %198 : vector<4xf32> to vector<1x1x4xf32>
    %200 = vector.broadcast %199 : vector<1x1x4xf32> to vector<1x16x4xf32>
    %201 = arith.mulf %196, %200 : vector<1x16x4xf32>
    %202 = arith.addf %195, %201 : vector<1x16x4xf32>
    %203 = vector.extract_strided_slice %168 {offsets = [1, 0, 0], sizes = [1, 16, 4], strides = [1, 1, 1]} : vector<2x16x4xf32> to vector<1x16x4xf32>
    %204 = vector.extract_strided_slice %0 {offsets = [2, 2, 0], sizes = [1, 1, 4], strides = [1, 1, 1]} : vector<3x3x4xf32> to vector<1x1x4xf32>
    %205 = vector.shape_cast %204 : vector<1x1x4xf32> to vector<4xf32>
    %206 = vector.shape_cast %205 : vector<4xf32> to vector<1x1x4xf32>
    %207 = vector.broadcast %206 : vector<1x1x4xf32> to vector<1x16x4xf32>
    %208 = arith.mulf %203, %207 : vector<1x16x4xf32>
    %209 = arith.addf %202, %208 : vector<1x16x4xf32>
    %210 = arith.addf %166, %209 : vector<1x16x4xf32>
    %c0_17 = arith.constant 0 : index
    %c6 = arith.constant 6 : index
    %c0_18 = arith.constant 0 : index
    %c0_19 = arith.constant 0 : index
    %211 = vector.load %arg7[%c0_17, %c6, %c0_18, %c0_19] : memref<1x8x16x4xf32, #tpu.memory_space<vmem>>, vector<1x1x16x4xf32>
    %212 = vector.shape_cast %211 : vector<1x1x16x4xf32> to vector<1x16x4xf32>
    %213 = vector.shape_cast %189 : vector<1x16x4xf32> to vector<1x1x16x4xf32>
    tpu.vector_store %arg7[%c0_17, %c6, %c0_18, %c0_19], %213 {strides = array<i32>} : memref<1x8x16x4xf32, #tpu.memory_space<vmem>>, vector<1x1x16x4xf32>,
    %c0_20 = arith.constant 0 : index
    %c7 = arith.constant 7 : index
    %c0_21 = arith.constant 0 : index
    %c0_22 = arith.constant 0 : index
    %214 = vector.load %arg7[%c0_20, %c7, %c0_21, %c0_22] : memref<1x8x16x4xf32, #tpu.memory_space<vmem>>, vector<1x1x16x4xf32>
    %215 = vector.shape_cast %214 : vector<1x1x16x4xf32> to vector<1x16x4xf32>
    %216 = vector.shape_cast %210 : vector<1x16x4xf32> to vector<1x1x16x4xf32>
    tpu.vector_store %arg7[%c0_20, %c7, %c0_21, %c0_22], %216 {strides = array<i32>} : memref<1x8x16x4xf32, #tpu.memory_space<vmem>>, vector<1x1x16x4xf32>,
    return
  }
  func.func @transform_0(%arg0: i32, %arg1: i32, %arg2: i32) -> (i32, i32, i32, i32) {
    %c0_i32 = arith.constant 0 : i32
    %c0_i32_0 = arith.constant 0 : i32
    return %arg0, %arg2, %c0_i32, %arg1 : i32, i32, i32, i32
  }
  func.func @transform_1(%arg0: i32, %arg1: i32, %arg2: i32) -> (i32, i32, i32, i32) {
    %c1_i32 = arith.constant 1 : i32
    %0 = arith.addi %arg2, %c1_i32 : i32
    %c4_i32 = arith.constant 4 : i32
    %1 = arith.muli %0, %c4_i32 : i32
    %c0_i32 = arith.constant 0 : i32
    %c0_i32_0 = arith.constant 0 : i32
    return %arg0, %1, %c0_i32, %arg1 : i32, i32, i32, i32
  }
  func.func @transform_2(%arg0: i32, %arg1: i32, %arg2: i32) -> (i32, i32, i32) {
    %c0_i32 = arith.constant 0 : i32
    %c0_i32_0 = arith.constant 0 : i32
    %c0_i32_1 = arith.constant 0 : i32
    return %c0_i32, %c0_i32_0, %arg1 : i32, i32, i32
  }
  func.func @transform_3(%arg0: i32, %arg1: i32, %arg2: i32) -> (i32, i32, i32) {
    %c0_i32 = arith.constant 0 : i32
    %c0_i32_0 = arith.constant 0 : i32
    %c0_i32_1 = arith.constant 0 : i32
    return %c0_i32, %c0_i32_0, %arg1 : i32, i32, i32
  }
  func.func @transform_4(%arg0: i32, %arg1: i32, %arg2: i32) -> (i32, i32, i32, i32) {
    %c0_i32 = arith.constant 0 : i32
    %c0_i32_0 = arith.constant 0 : i32
    return %arg0, %arg2, %c0_i32, %arg1 : i32, i32, i32, i32
  }
}

</mosaic_0001>

<llo_original>
// kernel: tpu_custom_call.1
$region0: #{tpu_custom_call.1}
  #allocation0 [shape = 'u32[]', space=smem, size = 0x4, offset = 0x4, fixed_abs, tag = 'smem constant byte address 0x4 - core index']
  #allocation1 [shape = 'u32[144,128]{1,0:T(1,128)}', space=vmem, size = 0x12000, scoped, tag = 'internal scratch']
  %s0 = inlined_call_operand.vmem [shape: f32[2,18,18,4], index: 0, kind: input, shape index: {}]
  %s1 = inlined_call_operand.vmem [shape: f32[2,18,18,4], index: 1, kind: input, shape index: {}]
  %s2 = inlined_call_operand.vmem [shape: f32[3,3,4], index: 2, kind: input, shape index: {}]
  %s3 = inlined_call_operand.vmem [shape: f32[1,1,4], index: 3, kind: input, shape index: {}]
  %s4 = inlined_call_operand.vmem [shape: f32[2,16,16,4], index: 4, kind: output, shape index: {}]
  %s5 = sld [smem:[#allocation0]]
  $region49: #{tpu_custom_call.1} parent=0
    _
  %s7 = ssub.s32 1, %s5
  %s8 = scalar_select 0, %s7, %s5
  loop: start=0, step=1, limit=6
  $region2: #{tpu_custom_call.1} parent=0 // loop_pre_header
    _
  $region3: #{tpu_custom_call.1} parent=0 // loop_header
    %s10 = sphi 0, %s14
    %p11 = scmp.ge.s32.totalorder %s10, 6
    %s17 = sphi 0, %s36
    %s18 = sphi 0, %s32
    %s19 = sphi 0, %s28
    %s20 = sphi 0, %s17
    %s21 = sphi 0, %s18
    %s22 = sphi 0, %s19
    %s23 = sphi 0, %s20
    %s24 = sphi 0, %s21
    %s25 = sphi 0, %s22
    %s43 = sphi 0, %s45
    %s46 = sphi 0, %s43
    %s47 = sphi 0, %s46
    %s63 = sphi 0, %s47
    %s77 = sphi 0, %s79
    %s80 = sphi 0, %s77
    %s81 = sphi 0, %s80
    %s97 = sphi 0, %s81
    %s103 = sphi 0, %s105
    %s106 = sphi 0, %s103
    %s107 = sphi 0, %s106
    %s123 = sphi 0, %s107
    %s129 = sphi 0, %s131
    %s132 = sphi 0, %s129
    %s133 = sphi 0, %s132
    %s149 = sphi 0, %s133
    %s159 = sphi 0, %s161
    %s162 = sphi 0, %s159
    %s163 = sphi 0, %s162
    %s179 = sphi 0, %s163
  $region4: #{tpu_custom_call.1} parent=0 // loop_header_branch
    %13 = sbr.rel (%p11) target = $region8
  $region5: #{tpu_custom_call.1} parent=0 // loop_body
    %s15 = ssub.s32 %s10, 1
    %s16 = ssub.s32 %s10, 2
    %s26 = sadd.s32 1, %s19
    %p27 = scmp.ge.s32.totalorder %s26, 2
    %s28 = scalar_select %p27, 0, %s26
    %s29 = sadd.s32 1, %s18
    %s30 = scalar_select %p27, %s29, %s18
    %p31 = scmp.ge.s32.totalorder %s30, 1
    %s32 = scalar_select %p31, 0, %s30
    %s33 = sadd.s32 1, %s17
    %s34 = scalar_select %p31, %s33, %s17
    %p35 = scmp.ge.s32.totalorder %s34, 2
    %s36 = scalar_select %p35, 0, %s34
    %s37 = ssub.s32 %s17, %s36
    %s38 = ssub.s32 %s19, %s28
    %s39 = sor.u32 %s37, %s38
    %s40 = ssub.s32 %s18, %s32
    %s41 = sor.u32 %s39, %s40
    %p42 = scmp.eq.s32.totalorder %s41, 0
    %s44 = sadd.s32 %s43, 1
    %s45 = scalar_select %p42, %s43, %s44
    %p48 = pneg %p42
    %p49 = scmp.eq.s32.totalorder %s10, 3
    %p50 = por %p48, %p49
    %p51 = scmp.ne.s32.totalorder %s43, %s46
    %p52 = scmp.eq.s32.totalorder %s10, 0
    %p53 = por %p51, %p52
    %p54 = scmp.ne.s32.totalorder %s43, %s46
    %p55 = scmp.eq.s32.totalorder %s15, 3
    %p56 = por %p54, %p55
    %p57 = scmp.ne.s32.totalorder %s46, %s47
    %p58 = scmp.eq.s32.totalorder %s15, 0
    %p59 = por %p57, %p58
    %p60 = scmp.ne.s32.totalorder %s46, %s47
    %p61 = scmp.eq.s32.totalorder %s16, 3
    %p62 = por %p60, %p61
    %p64 = scmp.ne.s32.totalorder %s47, %s63
    %p65 = scmp.eq.s32.totalorder %s16, 0
    %p66 = por %p64, %p65
    %s67 = sadd.s32 %s19, 1
    %s68 = smul.u32 %s67, 4
    %s69 = sadd.s32 %s28, 1
    %s70 = smul.u32 %s69, 4
    %s71 = ssub.s32 %s17, %s36
    %s72 = ssub.s32 %s68, %s70
    %s73 = sor.u32 %s71, %s72
    %s74 = ssub.s32 %s18, %s32
    %s75 = sor.u32 %s73, %s74
    %p76 = scmp.eq.s32.totalorder %s75, 0
    %s78 = sadd.s32 %s77, 1
    %s79 = scalar_select %p76, %s77, %s78
    %p82 = pneg %p76
    %p83 = scmp.eq.s32.totalorder %s10, 3
    %p84 = por %p82, %p83
    %p85 = scmp.ne.s32.totalorder %s77, %s80
    %p86 = scmp.eq.s32.totalorder %s10, 0
    %p87 = por %p85, %p86
    %p88 = scmp.ne.s32.totalorder %s77, %s80
    %p89 = scmp.eq.s32.totalorder %s15, 3
    %p90 = por %p88, %p89
    %p91 = scmp.ne.s32.totalorder %s80, %s81
    %p92 = scmp.eq.s32.totalorder %s15, 0
    %p93 = por %p91, %p92
    %p94 = scmp.ne.s32.totalorder %s80, %s81
    %p95 = scmp.eq.s32.totalorder %s16, 3
    %p96 = por %p94, %p95
    %p98 = scmp.ne.s32.totalorder %s81, %s97
    %p99 = scmp.eq.s32.totalorder %s16, 0
    %p100 = por %p98, %p99
    %s101 = ssub.s32 %s18, %s32
    %p102 = scmp.eq.s32.totalorder %s101, 0
    %s104 = sadd.s32 %s103, 1
    %s105 = scalar_select %p102, %s103, %s104
    %p108 = pneg %p102
    %p109 = scmp.eq.s32.totalorder %s10, 3
    %p110 = por %p108, %p109
    %p111 = scmp.ne.s32.totalorder %s103, %s106
    %p112 = scmp.eq.s32.totalorder %s10, 0
    %p113 = por %p111, %p112
    %p114 = scmp.ne.s32.totalorder %s103, %s106
    %p115 = scmp.eq.s32.totalorder %s15, 3
    %p116 = por %p114, %p115
    %p117 = scmp.ne.s32.totalorder %s106, %s107
    %p118 = scmp.eq.s32.totalorder %s15, 0
    %p119 = por %p117, %p118
    %p120 = scmp.ne.s32.totalorder %s106, %s107
    %p121 = scmp.eq.s32.totalorder %s16, 3
    %p122 = por %p120, %p121
    %p124 = scmp.ne.s32.totalorder %s107, %s123
    %p125 = scmp.eq.s32.totalorder %s16, 0
    %p126 = por %p124, %p125
    %s127 = ssub.s32 %s18, %s32
    %p128 = scmp.eq.s32.totalorder %s127, 0
    %s130 = sadd.s32 %s129, 1
    %s131 = scalar_select %p128, %s129, %s130
    %p134 = pneg %p128
    %p135 = scmp.eq.s32.totalorder %s10, 3
    %p136 = por %p134, %p135
    %p137 = scmp.ne.s32.totalorder %s129, %s132
    %p138 = scmp.eq.s32.totalorder %s10, 0
    %p139 = por %p137, %p138
    %p140 = scmp.ne.s32.totalorder %s129, %s132
    %p141 = scmp.eq.s32.totalorder %s15, 3
    %p142 = por %p140, %p141
    %p143 = scmp.ne.s32.totalorder %s132, %s133
    %p144 = scmp.eq.s32.totalorder %s15, 0
    %p145 = por %p143, %p144
    %p146 = scmp.ne.s32.totalorder %s132, %s133
    %p147 = scmp.eq.s32.totalorder %s16, 3
    %p148 = por %p146, %p147
    %p150 = scmp.ne.s32.totalorder %s133, %s149
    %p151 = scmp.eq.s32.totalorder %s16, 0
    %p152 = por %p150, %p151
    %s153 = ssub.s32 %s17, %s36
    %s154 = ssub.s32 %s19, %s28
    %s155 = sor.u32 %s153, %s154
    %s156 = ssub.s32 %s18, %s32
    %s157 = sor.u32 %s155, %s156
    %p158 = scmp.eq.s32.totalorder %s157, 0
    %s160 = sadd.s32 %s159, 1
    %s161 = scalar_select %p158, %s159, %s160
    %p164 = pneg %p158
    %p165 = scmp.eq.s32.totalorder %s10, 3
    %p166 = por %p164, %p165
    %p167 = scmp.ne.s32.totalorder %s159, %s162
    %p168 = scmp.eq.s32.totalorder %s10, 0
    %p169 = por %p167, %p168
    %p170 = scmp.ne.s32.totalorder %s159, %s162
    %p171 = scmp.eq.s32.totalorder %s15, 3
    %p172 = por %p170, %p171
    %p173 = scmp.ne.s32.totalorder %s162, %s163
    %p174 = scmp.eq.s32.totalorder %s15, 0
    %p175 = por %p173, %p174
    %p176 = scmp.ne.s32.totalorder %s162, %s163
    %p177 = scmp.eq.s32.totalorder %s16, 3
    %p178 = por %p176, %p177
    %p180 = scmp.ne.s32.totalorder %s163, %s179
    %p181 = scmp.eq.s32.totalorder %s16, 0
    %p182 = por %p180, %p181
    %p183 = scmp.le.s32.totalorder 1, %s10
    %p184 = scmp.lt.s32.totalorder %s10, 5
    %p185 = pnand %p183, %p184
    %p186 = pneg %p185
    // Predicated region
    $region9: #{tpu_custom_call.1} parent=5 // pred_check
      _
    $region10: #{tpu_custom_call.1} parent=5 // pred_check_branch
      %188 = sbr.rel (%p185) target = $region12
    $region11: #{tpu_custom_call.1} parent=5 // pred_region
      %s189 = ssub.s32 %s10, 1
      // Predicated region
      $region13: #{tpu_custom_call.1} parent=11 // pred_check
        %p190 = pneg %p119
      $region14: #{tpu_custom_call.1} parent=11 // pred_check_branch
        %192 = sbr.rel (%p190) target = $region16
      $region15: #{tpu_custom_call.1} parent=11 // pred_region
        %p193 = scmp.lt.s32.totalorder %s21, 0
        %s194 = scalar_select %p193, %s21, 0
        %s195 = smul.addr %s194, 4
        %s196 = scalar_lea.vmem %s2, %s195
      $region16: #{tpu_custom_call.1} parent=11 // pred_fallthru
        _
      // Predicated region
      $region17: #{tpu_custom_call.1} parent=11 // pred_check
        %p197 = pneg %p145
      $region18: #{tpu_custom_call.1} parent=11 // pred_check_branch
        %199 = sbr.rel (%p197) target = $region20
      $region19: #{tpu_custom_call.1} parent=11 // pred_region
        %p200 = scmp.lt.s32.totalorder %s21, 0
        %s201 = scalar_select %p200, %s21, 0
        %s202 = scalar_lea.vmem %s3, %s201
      $region20: #{tpu_custom_call.1} parent=11 // pred_fallthru
        _
    $region12: #{tpu_custom_call.1} parent=5 // pred_fallthru
      _
    %p203 = scmp.lt.s32.totalorder %s10, 4
    // Predicated region
    $region21: #{tpu_custom_call.1} parent=5 // pred_check
      %p204 = pneg %p203
    $region22: #{tpu_custom_call.1} parent=5 // pred_check_branch
      %206 = sbr.rel (%p204) target = $region24
    $region23: #{tpu_custom_call.1} parent=5 // pred_region
      // Predicated region
      $region25: #{tpu_custom_call.1} parent=23 // pred_check
        %p207 = pneg %p53
      $region26: #{tpu_custom_call.1} parent=23 // pred_check_branch
        %209 = sbr.rel (%p207) target = $region28
      $region27: #{tpu_custom_call.1} parent=23 // pred_region
        %s210 = smul.u32 8, %s19
        %s211 = ssub.s32 18, %s210
        %p212 = scmp.lt.s32.totalorder %s211, 8
        %s213 = scalar_select %p212, %s211, 8
        %s214 = smul.u32 128, %s213
        %s215 = smul.u32 %s214, 3
        %p216 = scmp.lt.s32.totalorder %s17, 1
        %s217 = scalar_select %p216, %s17, 1
        %p218 = scmp.lt.s32.totalorder %s210, 17
        %s219 = scalar_select %p218, %s210, 17
        %p220 = scmp.lt.s32.totalorder %s18, 0
        %s221 = scalar_select %p220, %s18, 0
        %s222 = smul.addr %s219, 3
        %s223 = sadd.s32 %s221, %s222
        %s224 = smul.addr %s217, 54
        %s225 = sadd.s32 %s223, %s224
        %s226 = smul.addr %s225, 8
        %s227 = scalar_lea.vmem %s0, %s226
        %s228 = smul.u32 8, %s19
        %s229 = ssub.s32 18, %s228
        %p230 = scmp.lt.s32.totalorder %s229, 8
        %s231 = scalar_select %p230, %s229, 8
        %s232 = smul.u32 128, %s231
        %s233 = smul.u32 %s232, 3
      $region28: #{tpu_custom_call.1} parent=23 // pred_fallthru
        _
      // Predicated region
      $region29: #{tpu_custom_call.1} parent=23 // pred_check
        %p234 = pneg %p87
      $region30: #{tpu_custom_call.1} parent=23 // pred_check_branch
        %236 = sbr.rel (%p234) target = $region32
      $region31: #{tpu_custom_call.1} parent=23 // pred_region
        %s237 = sadd.s32 %s19, 1
        %s238 = smul.u32 %s237, 4
        %s239 = smul.u32 2, %s238
        %p240 = scmp.lt.s32.totalorder %s17, 1
        %s241 = scalar_select %p240, %s17, 1
        %p242 = scmp.lt.s32.totalorder %s239, 17
        %s243 = scalar_select %p242, %s239, 17
        %p244 = scmp.lt.s32.totalorder %s18, 0
        %s245 = scalar_select %p244, %s18, 0
        %s246 = smul.addr %s243, 3
        %s247 = sadd.s32 %s245, %s246
        %s248 = smul.addr %s241, 54
        %s249 = sadd.s32 %s247, %s248
        %s250 = smul.addr %s249, 8
        %s251 = scalar_lea.vmem %s1, %s250
        %s252 = sadd.s32 %s19, 1
        %s253 = smul.u32 %s252, 4
        %s254 = smul.u32 2, %s253
      $region32: #{tpu_custom_call.1} parent=23 // pred_fallthru
        _
    $region24: #{tpu_custom_call.1} parent=5 // pred_fallthru
      _
    %p255 = scmp.le.s32.totalorder 1, %s10
    %p256 = scmp.lt.s32.totalorder %s10, 5
    %p257 = pnand %p255, %p256
    %p258 = pneg %p257
    // Predicated region
    $region33: #{tpu_custom_call.1} parent=5 // pred_check
      _
    $region34: #{tpu_custom_call.1} parent=5 // pred_check_branch
      %260 = sbr.rel (%p257) target = $region36
    $region35: #{tpu_custom_call.1} parent=5 // pred_region
      %s261 = ssub.s32 %s10, 1
      %s262 = smul.u32 8, %s22
      %s263 = ssub.s32 18, %s262
      %p264 = scmp.lt.s32.totalorder %s263, 8
      %s265 = scalar_select %p264, %s263, 8
      %s266 = smul.u32 128, %s265
      %s267 = smul.u32 %s266, 3
      %p268 = scmp.lt.s32.totalorder %s20, 1
      %s269 = scalar_select %p268, %s20, 1
      %p270 = scmp.lt.s32.totalorder %s262, 17
      %s271 = scalar_select %p270, %s262, 17
      %p272 = scmp.lt.s32.totalorder %s21, 0
      %s273 = scalar_select %p272, %s21, 0
      %s274 = smul.addr %s271, 3
      %s275 = sadd.s32 %s273, %s274
      %s276 = smul.addr %s269, 54
      %s277 = sadd.s32 %s275, %s276
      %s278 = smul.addr %s277, 8
      %s279 = scalar_lea.vmem %s0, %s278
      %p280 = pneg %p59
      %p281 = pneg %p56
      %s282 = sadd.s32 %s22, 1
      %s283 = smul.u32 %s282, 4
      %s284 = smul.u32 2, %s283
      %p285 = scmp.lt.s32.totalorder %s20, 1
      %s286 = scalar_select %p285, %s20, 1
      %p287 = scmp.lt.s32.totalorder %s284, 17
      %s288 = scalar_select %p287, %s284, 17
      %p289 = scmp.lt.s32.totalorder %s21, 0
      %s290 = scalar_select %p289, %s21, 0
      %s291 = smul.addr %s288, 3
      %s292 = sadd.s32 %s290, %s291
      %s293 = smul.addr %s286, 54
      %s294 = sadd.s32 %s292, %s293
      %s295 = smul.addr %s294, 8
      %s296 = scalar_lea.vmem %s1, %s295
      %p297 = pneg %p93
      %p298 = pneg %p90
      %p299 = scmp.lt.s32.totalorder %s21, 0
      %s300 = scalar_select %p299, %s21, 0
      %s301 = smul.addr %s300, 4
      %s302 = scalar_lea.vmem %s2, %s301
      %p303 = pneg %p119
      %p304 = pneg %p116
      %p305 = scmp.lt.s32.totalorder %s21, 0
      %s306 = scalar_select %p305, %s21, 0
      %s307 = scalar_lea.vmem %s3, %s306
      %p308 = pneg %p145
      %p309 = pneg %p142
      %p310 = pneg %p175
      %p311 = pneg %p172
      %s312 = smul.u32 8, %s22
      %p313 = scmp.lt.s32.totalorder %s20, 1
      %s314 = scalar_select %p313, %s20, 1
      %p315 = scmp.lt.s32.totalorder %s312, 15
      %s316 = scalar_select %p315, %s312, 15
      %p317 = scmp.lt.s32.totalorder %s21, 0
      %s318 = scalar_select %p317, %s21, 0
      %s319 = smul.addr %s316, 2
      %s320 = sadd.s32 %s318, %s319
      %s321 = smul.addr %s314, 32
      %s322 = sadd.s32 %s320, %s321
      %s323 = smul.addr %s322, 8
      %s324 = scalar_lea.vmem %s4, %s323
      %s325 = smul.u32 8, %s22
      %s326 = ssub.s32 18, %s325
      %p327 = scmp.lt.s32.totalorder %s326, 8
      %s328 = scalar_select %p327, %s326, 8
      %s329 = smul.u32 128, %s328
      %s330 = smul.u32 %s329, 3
      %p331 = scmp.lt.s32.totalorder %s20, 1
      %s332 = scalar_select %p331, %s20, 1
      %p333 = scmp.lt.s32.totalorder %s325, 17
      %s334 = scalar_select %p333, %s325, 17
      %p335 = scmp.lt.s32.totalorder %s21, 0
      %s336 = scalar_select %p335, %s21, 0
      %s337 = smul.addr %s334, 3
      %s338 = sadd.s32 %s336, %s337
      %s339 = smul.addr %s332, 54
      %s340 = sadd.s32 %s338, %s339
      %s341 = smul.addr %s340, 8
      %s342 = scalar_lea.vmem %s0, %s341
      %s343 = smul.u32 8, %s22
      %s344 = ssub.s32 18, %s343
      %p345 = scmp.lt.s32.totalorder %s344, 8
      %s346 = scalar_select %p345, %s344, 8
      %s347 = smul.u32 128, %s346
      %s348 = smul.u32 %s347, 3
      %s349 = sadd.s32 %s22, 1
      %s350 = smul.u32 %s349, 4
      %s351 = smul.u32 2, %s350
      %p352 = scmp.lt.s32.totalorder %s20, 1
      %s353 = scalar_select %p352, %s20, 1
      %p354 = scmp.lt.s32.totalorder %s351, 17
      %s355 = scalar_select %p354, %s351, 17
      %p356 = scmp.lt.s32.totalorder %s21, 0
      %s357 = scalar_select %p356, %s21, 0
      %s358 = smul.addr %s355, 3
      %s359 = sadd.s32 %s357, %s358
      %s360 = smul.addr %s353, 54
      %s361 = sadd.s32 %s359, %s360
      %s362 = smul.addr %s361, 8
      %s363 = scalar_lea.vmem %s1, %s362
      %s364 = sadd.s32 %s22, 1
      %s365 = smul.u32 %s364, 4
      %s366 = smul.u32 2, %s365
      %p367 = scmp.lt.s32.totalorder %s21, 0
      %s368 = scalar_select %p367, %s21, 0
      %s369 = smul.addr %s368, 4
      %s370 = scalar_lea.vmem %s2, %s369
      %p371 = scmp.lt.s32.totalorder %s21, 0
      %s372 = scalar_select %p371, %s21, 0
      %s373 = scalar_lea.vmem %s3, %s372
      %s374 = smul.u32 8, %s22
      %p375 = scmp.lt.s32.totalorder %s20, 1
      %s376 = scalar_select %p375, %s20, 1
      %p377 = scmp.lt.s32.totalorder %s374, 15
      %s378 = scalar_select %p377, %s374, 15
      %p379 = scmp.lt.s32.totalorder %s21, 0
      %s380 = scalar_select %p379, %s21, 0
      %s381 = smul.addr %s378, 2
      %s382 = sadd.s32 %s380, %s381
      %s383 = smul.addr %s376, 32
      %s384 = sadd.s32 %s382, %s383
      %s385 = smul.addr %s384, 8
      %s386 = scalar_lea.vmem %s4, %s385
      %s387 = smul.u32 8, %s22
      %v388 = vld [vmem:[%s370] sm:$0x7]
      %v389 = vld [vmem:[%s370 + $0x4] sm:$0x7]
      %v390 = vld [vmem:[%s370 + $0x8] sm:$0x7]
      %v391 = vld [vmem:[%s373] sm:$0x1]
      %v392 = vld [vmem:[%s342] sm:$0xff]
      %v393 = vld [vmem:[%s342 + $0x8] sm:$0xff]
      %v394 = vld [vmem:[%s342 + $0x10] sm:$0x3]
      %v395 = vld [vmem:[%s342 + $0x18] sm:$0xff]
      %v396 = vld [vmem:[%s342 + $0x20] sm:$0xff]
      %v397 = vld [vmem:[%s342 + $0x28] sm:$0x3]
      %v398 = vld [vmem:[%s342 + $0x30] sm:$0xff]
      %v399 = vld [vmem:[%s342 + $0x38] sm:$0xff]
      %v400 = vld [vmem:[%s342 + $0x40] sm:$0x3]
      %v401 = vld [vmem:[%s342 + $0x48] sm:$0xff]
      %v402 = vld [vmem:[%s342 + $0x50] sm:$0xff]
      %v403 = vld [vmem:[%s342 + $0x58] sm:$0x3]
      %v404 = vld [vmem:[%s342 + $0x60] sm:$0xff]
      %v405 = vld [vmem:[%s342 + $0x68] sm:$0xff]
      %v406 = vld [vmem:[%s342 + $0x70] sm:$0x3]
      %v407 = vld [vmem:[%s342 + $0x78] sm:$0xff]
      %v408 = vld [vmem:[%s342 + $0x80] sm:$0xff]
      %v409 = vld [vmem:[%s342 + $0x88] sm:$0x3]
      %v410 = vld [vmem:[%s342 + $0x90] sm:$0xff]
      %v411 = vld [vmem:[%s342 + $0x98] sm:$0xff]
      %v412 = vld [vmem:[%s342 + $0xa0] sm:$0x3]
      %v413 = vld [vmem:[%s342 + $0xa8] sm:$0xff]
      %v414 = vld [vmem:[%s342 + $0xb0] sm:$0xff]
      %v415 = vld [vmem:[%s342 + $0xb8] sm:$0x3]
      %v416 = vlaneseq
      %v417 = vshrl.u32 %v416, 7
      %v418 = vsub.s32 0, %v417
      %v419 = vrot.slane %v388, %v418
      %v420 = vmul.f32 %v392, %v419
      %v421 = vmul.f32 %v393, %v419
      %v422 = vmul.f32 %v395, %v419
      %v423 = vmul.f32 %v396, %v419
      %v424 = vmul.f32 %v398, %v419
      %v425 = vmul.f32 %v399, %v419
      %v426 = vmul.f32 %v401, %v419
      %v427 = vmul.f32 %v402, %v419
      %v428 = vmul.f32 %v404, %v419
      %v429 = vmul.f32 %v405, %v419
      %v430 = vmul.f32 %v407, %v419
      %v431 = vmul.f32 %v408, %v419
      %v432 = vlaneseq
      %v433 = vshrl.u32 %v432, 7
      %v434 = vsub.s32 0, %v433
      %v435 = vrot.slane %v389, %v434
      %v436 = vmul.f32 %v395, %v435
      %v437 = vmul.f32 %v396, %v435
      %v438 = vmul.f32 %v398, %v435
      %v439 = vmul.f32 %v399, %v435
      %v440 = vmul.f32 %v401, %v435
      %v441 = vmul.f32 %v402, %v435
      %v442 = vmul.f32 %v404, %v435
      %v443 = vmul.f32 %v405, %v435
      %v444 = vmul.f32 %v407, %v435
      %v445 = vmul.f32 %v408, %v435
      %v446 = vmul.f32 %v410, %v435
      %v447 = vmul.f32 %v411, %v435
      %v448 = vadd.f32 %v420, %v436
      %v449 = vadd.f32 %v421, %v437
      %v450 = vadd.f32 %v422, %v438
      %v451 = vadd.f32 %v423, %v439
      %v452 = vadd.f32 %v424, %v440
      %v453 = vadd.f32 %v425, %v441
      %v454 = vadd.f32 %v426, %v442
      %v455 = vadd.f32 %v427, %v443
      %v456 = vadd.f32 %v428, %v444
      %v457 = vadd.f32 %v429, %v445
      %v458 = vadd.f32 %v430, %v446
      %v459 = vadd.f32 %v431, %v447
      %v460 = vlaneseq
      %v461 = vshrl.u32 %v460, 7
      %v462 = vsub.s32 0, %v461
      %v463 = vrot.slane %v390, %v462
      %v464 = vmul.f32 %v398, %v463
      %v465 = vmul.f32 %v399, %v463
      %v466 = vmul.f32 %v401, %v463
      %v467 = vmul.f32 %v402, %v463
      %v468 = vmul.f32 %v404, %v463
      %v469 = vmul.f32 %v405, %v463
      %v470 = vmul.f32 %v407, %v463
      %v471 = vmul.f32 %v408, %v463
      %v472 = vmul.f32 %v410, %v463
      %v473 = vmul.f32 %v411, %v463
      %v474 = vmul.f32 %v413, %v463
      %v475 = vmul.f32 %v414, %v463
      %v476 = vadd.f32 %v448, %v464
      %v477 = vadd.f32 %v449, %v465
      %v478 = vadd.f32 %v450, %v466
      %v479 = vadd.f32 %v451, %v467
      %v480 = vadd.f32 %v452, %v468
      %v481 = vadd.f32 %v453, %v469
      %v482 = vadd.f32 %v454, %v470
      %v483 = vadd.f32 %v455, %v471
      %v484 = vadd.f32 %v456, %v472
      %v485 = vadd.f32 %v457, %v473
      %v486 = vadd.f32 %v458, %v474
      %v487 = vadd.f32 %v459, %v475
      %v489 = vlaneseq
      %v490 = vshrl.u32 %v489, 7
      %v491 = vsub.s32 0, %v490
      %v492 = vrot.slane %v391, %v491
      %v494 = vadd.f32 %v492, %v476
      %v495 = vadd.f32 %v492, %v477
      %v496 = vadd.f32 %v492, %v478
      %v497 = vadd.f32 %v492, %v479
      %v498 = vadd.f32 %v492, %v480
      %v499 = vadd.f32 %v492, %v481
      %v500 = vadd.f32 %v492, %v482
      %v501 = vadd.f32 %v492, %v483
      %v502 = vadd.f32 %v492, %v484
      %v503 = vadd.f32 %v492, %v485
      %v504 = vadd.f32 %v492, %v486
      %v505 = vadd.f32 %v492, %v487
      %v506 = vlaneseq
      %v507 = vshrl.u32 %v506, 7
      %v508 = vsub.s32 1, %v507
      %v509 = vrot.slane %v388, %v508
      %v510 = vmul.f32 %v392, %v509
      %v511 = vmul.f32 %v393, %v509
      %v512 = vmul.f32 %v394, %v509
      %v513 = vmul.f32 %v395, %v509
      %v514 = vmul.f32 %v396, %v509
      %v515 = vmul.f32 %v397, %v509
      %v516 = vmul.f32 %v398, %v509
      %v517 = vmul.f32 %v399, %v509
      %v518 = vmul.f32 %v400, %v509
      %v519 = vmul.f32 %v401, %v509
      %v520 = vmul.f32 %v402, %v509
      %v521 = vmul.f32 %v403, %v509
      %v522 = vmul.f32 %v404, %v509
      %v523 = vmul.f32 %v405, %v509
      %v524 = vmul.f32 %v406, %v509
      %v525 = vmul.f32 %v407, %v509
      %v526 = vmul.f32 %v408, %v509
      %v527 = vmul.f32 %v409, %v509
      %v528 = vlaneseq
      %v529 = vshrl.u32 %v528, 7
      %v530 = vsub.s32 1, %v529
      %v531 = vrot.slane %v389, %v530
      %v532 = vmul.f32 %v395, %v531
      %v533 = vmul.f32 %v396, %v531
      %v534 = vmul.f32 %v397, %v531
      %v535 = vmul.f32 %v398, %v531
      %v536 = vmul.f32 %v399, %v531
      %v537 = vmul.f32 %v400, %v531
      %v538 = vmul.f32 %v401, %v531
      %v539 = vmul.f32 %v402, %v531
      %v540 = vmul.f32 %v403, %v531
      %v541 = vmul.f32 %v404, %v531
      %v542 = vmul.f32 %v405, %v531
      %v543 = vmul.f32 %v406, %v531
      %v544 = vmul.f32 %v407, %v531
      %v545 = vmul.f32 %v408, %v531
      %v546 = vmul.f32 %v409, %v531
      %v547 = vmul.f32 %v410, %v531
      %v548 = vmul.f32 %v411, %v531
      %v549 = vmul.f32 %v412, %v531
      %v550 = vadd.f32 %v510, %v532
      %v551 = vadd.f32 %v511, %v533
      %v552 = vadd.f32 %v512, %v534
      %v553 = vadd.f32 %v513, %v535
      %v554 = vadd.f32 %v514, %v536
      %v555 = vadd.f32 %v515, %v537
      %v556 = vadd.f32 %v516, %v538
      %v557 = vadd.f32 %v517, %v539
      %v558 = vadd.f32 %v518, %v540
      %v559 = vadd.f32 %v519, %v541
      %v560 = vadd.f32 %v520, %v542
      %v561 = vadd.f32 %v521, %v543
      %v562 = vadd.f32 %v522, %v544
      %v563 = vadd.f32 %v523, %v545
      %v564 = vadd.f32 %v524, %v546
      %v565 = vadd.f32 %v525, %v547
      %v566 = vadd.f32 %v526, %v548
      %v567 = vadd.f32 %v527, %v549
      %v568 = vlaneseq
      %v569 = vshrl.u32 %v568, 7
      %v570 = vsub.s32 1, %v569
      %v571 = vrot.slane %v390, %v570
      %v572 = vmul.f32 %v398, %v571
      %v573 = vmul.f32 %v399, %v571
      %v574 = vmul.f32 %v400, %v571
      %v575 = vmul.f32 %v401, %v571
      %v576 = vmul.f32 %v402, %v571
      %v577 = vmul.f32 %v403, %v571
      %v578 = vmul.f32 %v404, %v571
      %v579 = vmul.f32 %v405, %v571
      %v580 = vmul.f32 %v406, %v571
      %v581 = vmul.f32 %v407, %v571
      %v582 = vmul.f32 %v408, %v571
      %v583 = vmul.f32 %v409, %v571
      %v584 = vmul.f32 %v410, %v571
      %v585 = vmul.f32 %v411, %v571
      %v586 = vmul.f32 %v412, %v571
      %v587 = vmul.f32 %v413, %v571
      %v588 = vmul.f32 %v414, %v571
      %v589 = vmul.f32 %v415, %v571
      %v590 = vadd.f32 %v550, %v572
      %v591 = vadd.f32 %v551, %v573
      %v592 = vadd.f32 %v552, %v574
      %v593 = vadd.f32 %v553, %v575
      %v594 = vadd.f32 %v554, %v576
      %v595 = vadd.f32 %v555, %v577
      %v596 = vadd.f32 %v556, %v578
      %v597 = vadd.f32 %v557, %v579
      %v598 = vadd.f32 %v558, %v580
      %v599 = vadd.f32 %v559, %v581
      %v600 = vadd.f32 %v560, %v582
      %v601 = vadd.f32 %v561, %v583
      %v602 = vadd.f32 %v562, %v584
      %v603 = vadd.f32 %v563, %v585
      %v604 = vadd.f32 %v564, %v586
      %v605 = vadd.f32 %v565, %v587
      %v606 = vadd.f32 %v566, %v588
      %v607 = vadd.f32 %v567, %v589
      %vm626 = vcmask 1046528
      %v627 = vrot.slane %v590, 1
      %v628 = vrot.slane %v591, 1
      %v629 = vsel %vm626, %v627, %v628
      %v630 = vrot.slane %v592, 1
      %v631 = vsel %vm626, %v628, %v630
      %v632 = vrot.slane %v593, 1
      %v633 = vrot.slane %v594, 1
      %v634 = vsel %vm626, %v632, %v633
      %v635 = vrot.slane %v595, 1
      %v636 = vsel %vm626, %v633, %v635
      %v637 = vrot.slane %v596, 1
      %v638 = vrot.slane %v597, 1
      %v639 = vsel %vm626, %v637, %v638
      %v640 = vrot.slane %v598, 1
      %v641 = vsel %vm626, %v638, %v640
      %v642 = vrot.slane %v599, 1
      %v643 = vrot.slane %v600, 1
      %v644 = vsel %vm626, %v642, %v643
      %v645 = vrot.slane %v601, 1
      %v646 = vsel %vm626, %v643, %v645
      %v647 = vrot.slane %v602, 1
      %v648 = vrot.slane %v603, 1
      %v649 = vsel %vm626, %v647, %v648
      %v650 = vrot.slane %v604, 1
      %v651 = vsel %vm626, %v648, %v650
      %v652 = vrot.slane %v605, 1
      %v653 = vrot.slane %v606, 1
      %v654 = vsel %vm626, %v652, %v653
      %v655 = vrot.slane %v607, 1
      %v656 = vsel %vm626, %v653, %v655
      %v669 = vadd.f32 %v494, %v629
      %v670 = vadd.f32 %v495, %v631
      %v671 = vadd.f32 %v496, %v634
      %v672 = vadd.f32 %v497, %v636
      %v673 = vadd.f32 %v498, %v639
      %v674 = vadd.f32 %v499, %v641
      %v675 = vadd.f32 %v500, %v644
      %v676 = vadd.f32 %v501, %v646
      %v677 = vadd.f32 %v502, %v649
      %v678 = vadd.f32 %v503, %v651
      %v679 = vadd.f32 %v504, %v654
      %v680 = vadd.f32 %v505, %v656
      %v681 = vlaneseq
      %v682 = vshrl.u32 %v681, 7
      %v683 = vsub.s32 2, %v682
      %v684 = vrot.slane %v388, %v683
      %v685 = vmul.f32 %v392, %v684
      %v686 = vmul.f32 %v393, %v684
      %v687 = vmul.f32 %v394, %v684
      %v688 = vmul.f32 %v395, %v684
      %v689 = vmul.f32 %v396, %v684
      %v690 = vmul.f32 %v397, %v684
      %v691 = vmul.f32 %v398, %v684
      %v692 = vmul.f32 %v399, %v684
      %v693 = vmul.f32 %v400, %v684
      %v694 = vmul.f32 %v401, %v684
      %v695 = vmul.f32 %v402, %v684
      %v696 = vmul.f32 %v403, %v684
      %v697 = vmul.f32 %v404, %v684
      %v698 = vmul.f32 %v405, %v684
      %v699 = vmul.f32 %v406, %v684
      %v700 = vmul.f32 %v407, %v684
      %v701 = vmul.f32 %v408, %v684
      %v702 = vmul.f32 %v409, %v684
      %v703 = vlaneseq
      %v704 = vshrl.u32 %v703, 7
      %v705 = vsub.s32 2, %v704
      %v706 = vrot.slane %v389, %v705
      %v707 = vmul.f32 %v395, %v706
      %v708 = vmul.f32 %v396, %v706
      %v709 = vmul.f32 %v397, %v706
      %v710 = vmul.f32 %v398, %v706
      %v711 = vmul.f32 %v399, %v706
      %v712 = vmul.f32 %v400, %v706
      %v713 = vmul.f32 %v401, %v706
      %v714 = vmul.f32 %v402, %v706
      %v715 = vmul.f32 %v403, %v706
      %v716 = vmul.f32 %v404, %v706
      %v717 = vmul.f32 %v405, %v706
      %v718 = vmul.f32 %v406, %v706
      %v719 = vmul.f32 %v407, %v706
      %v720 = vmul.f32 %v408, %v706
      %v721 = vmul.f32 %v409, %v706
      %v722 = vmul.f32 %v410, %v706
      %v723 = vmul.f32 %v411, %v706
      %v724 = vmul.f32 %v412, %v706
      %v725 = vadd.f32 %v685, %v707
      %v726 = vadd.f32 %v686, %v708
      %v727 = vadd.f32 %v687, %v709
      %v728 = vadd.f32 %v688, %v710
      %v729 = vadd.f32 %v689, %v711
      %v730 = vadd.f32 %v690, %v712
      %v731 = vadd.f32 %v691, %v713
      %v732 = vadd.f32 %v692, %v714
      %v733 = vadd.f32 %v693, %v715
      %v734 = vadd.f32 %v694, %v716
      %v735 = vadd.f32 %v695, %v717
      %v736 = vadd.f32 %v696, %v718
      %v737 = vadd.f32 %v697, %v719
      %v738 = vadd.f32 %v698, %v720
      %v739 = vadd.f32 %v699, %v721
      %v740 = vadd.f32 %v700, %v722
      %v741 = vadd.f32 %v701, %v723
      %v742 = vadd.f32 %v702, %v724
      %v743 = vlaneseq
      %v744 = vshrl.u32 %v743, 7
      %v745 = vsub.s32 2, %v744
      %v746 = vrot.slane %v390, %v745
      %v747 = vmul.f32 %v398, %v746
      %v748 = vmul.f32 %v399, %v746
      %v749 = vmul.f32 %v400, %v746
      %v750 = vmul.f32 %v401, %v746
      %v751 = vmul.f32 %v402, %v746
      %v752 = vmul.f32 %v403, %v746
      %v753 = vmul.f32 %v404, %v746
      %v754 = vmul.f32 %v405, %v746
      %v755 = vmul.f32 %v406, %v746
      %v756 = vmul.f32 %v407, %v746
      %v757 = vmul.f32 %v408, %v746
      %v758 = vmul.f32 %v409, %v746
      %v759 = vmul.f32 %v410, %v746
      %v760 = vmul.f32 %v411, %v746
      %v761 = vmul.f32 %v412, %v746
      %v762 = vmul.f32 %v413, %v746
      %v763 = vmul.f32 %v414, %v746
      %v764 = vmul.f32 %v415, %v746
      %v765 = vadd.f32 %v725, %v747
      %v766 = vadd.f32 %v726, %v748
      %v767 = vadd.f32 %v727, %v749
      %v768 = vadd.f32 %v728, %v750
      %v769 = vadd.f32 %v729, %v751
      %v770 = vadd.f32 %v730, %v752
      %v771 = vadd.f32 %v731, %v753
      %v772 = vadd.f32 %v732, %v754
      %v773 = vadd.f32 %v733, %v755
      %v774 = vadd.f32 %v734, %v756
      %v775 = vadd.f32 %v735, %v757
      %v776 = vadd.f32 %v736, %v758
      %v777 = vadd.f32 %v737, %v759
      %v778 = vadd.f32 %v738, %v760
      %v779 = vadd.f32 %v739, %v761
      %v780 = vadd.f32 %v740, %v762
      %v781 = vadd.f32 %v741, %v763
      %v782 = vadd.f32 %v742, %v764
      %vm801 = vcmask 1045504
      %v802 = vrot.slane %v765, 2
      %v803 = vrot.slane %v766, 2
      %v804 = vsel %vm801, %v802, %v803
      %v805 = vrot.slane %v767, 2
      %v806 = vsel %vm801, %v803, %v805
      %v807 = vrot.slane %v768, 2
      %v808 = vrot.slane %v769, 2
      %v809 = vsel %vm801, %v807, %v808
      %v810 = vrot.slane %v770, 2
      %v811 = vsel %vm801, %v808, %v810
      %v812 = vrot.slane %v771, 2
      %v813 = vrot.slane %v772, 2
      %v814 = vsel %vm801, %v812, %v813
      %v815 = vrot.slane %v773, 2
      %v816 = vsel %vm801, %v813, %v815
      %v817 = vrot.slane %v774, 2
      %v818 = vrot.slane %v775, 2
      %v819 = vsel %vm801, %v817, %v818
      %v820 = vrot.slane %v776, 2
      %v821 = vsel %vm801, %v818, %v820
      %v822 = vrot.slane %v777, 2
      %v823 = vrot.slane %v778, 2
      %v824 = vsel %vm801, %v822, %v823
      %v825 = vrot.slane %v779, 2
      %v826 = vsel %vm801, %v823, %v825
      %v827 = vrot.slane %v780, 2
      %v828 = vrot.slane %v781, 2
      %v829 = vsel %vm801, %v827, %v828
      %v830 = vrot.slane %v782, 2
      %v831 = vsel %vm801, %v828, %v830
      %v844 = vadd.f32 %v669, %v804
      %v845 = vadd.f32 %v670, %v806
      %v846 = vadd.f32 %v671, %v809
      %v847 = vadd.f32 %v672, %v811
      %v848 = vadd.f32 %v673, %v814
      %v849 = vadd.f32 %v674, %v816
      %v850 = vadd.f32 %v675, %v819
      %v851 = vadd.f32 %v676, %v821
      %v852 = vadd.f32 %v677, %v824
      %v853 = vadd.f32 %v678, %v826
      %v854 = vadd.f32 %v679, %v829
      %v855 = vadd.f32 %v680, %v831
      %vm856 = vcmask 31744
      %857 = vst.msk [vmem:[%s386] sm:$0xff] %vm856, %v844
      %858 = vst.msk [vmem:[%s386 + $0x8] sm:$0xff] %vm856, %v845
      %859 = vst.msk [vmem:[%s386 + $0x10] sm:$0xff] %vm856, %v846
      %860 = vst.msk [vmem:[%s386 + $0x18] sm:$0xff] %vm856, %v847
      %861 = vst.msk [vmem:[%s386 + $0x20] sm:$0xff] %vm856, %v848
      %862 = vst.msk [vmem:[%s386 + $0x28] sm:$0xff] %vm856, %v849
      %863 = vst.msk [vmem:[%s386 + $0x30] sm:$0xff] %vm856, %v850
      %864 = vst.msk [vmem:[%s386 + $0x38] sm:$0xff] %vm856, %v851
      %865 = vst.msk [vmem:[%s386 + $0x40] sm:$0xff] %vm856, %v852
      %866 = vst.msk [vmem:[%s386 + $0x48] sm:$0xff] %vm856, %v853
      %867 = vst.msk [vmem:[%s386 + $0x50] sm:$0xff] %vm856, %v854
      %868 = vst.msk [vmem:[%s386 + $0x58] sm:$0xff] %vm856, %v855
      %v869 = vld [vmem:[%s363] sm:$0xff]
      %v870 = vld [vmem:[%s363 + $0x8] sm:$0xff]
      %v871 = vld [vmem:[%s363 + $0x10] sm:$0x3]
      %v872 = vld [vmem:[%s363 + $0x18] sm:$0xff]
      %v873 = vld [vmem:[%s363 + $0x20] sm:$0xff]
      %v874 = vld [vmem:[%s363 + $0x28] sm:$0x3]
      %v875 = vmul.f32 %v410, %v419
      %v876 = vmul.f32 %v411, %v419
      %v877 = vmul.f32 %v413, %v435
      %v878 = vmul.f32 %v414, %v435
      %v879 = vadd.f32 %v875, %v877
      %v880 = vadd.f32 %v876, %v878
      %v881 = vmul.f32 %v869, %v463
      %v882 = vmul.f32 %v870, %v463
      %v883 = vadd.f32 %v879, %v881
      %v884 = vadd.f32 %v880, %v882
      %v885 = vadd.f32 %v492, %v883
      %v886 = vadd.f32 %v492, %v884
      %v887 = vmul.f32 %v413, %v419
      %v888 = vmul.f32 %v414, %v419
      %v889 = vmul.f32 %v869, %v435
      %v890 = vmul.f32 %v870, %v435
      %v891 = vadd.f32 %v887, %v889
      %v892 = vadd.f32 %v888, %v890
      %v893 = vmul.f32 %v872, %v463
      %v894 = vmul.f32 %v873, %v463
      %v895 = vadd.f32 %v891, %v893
      %v896 = vadd.f32 %v892, %v894
      %v897 = vadd.f32 %v492, %v895
      %v898 = vadd.f32 %v492, %v896
      %v899 = vmul.f32 %v410, %v509
      %v900 = vmul.f32 %v411, %v509
      %v901 = vmul.f32 %v412, %v509
      %v902 = vmul.f32 %v413, %v531
      %v903 = vmul.f32 %v414, %v531
      %v904 = vmul.f32 %v415, %v531
      %v905 = vadd.f32 %v899, %v902
      %v906 = vadd.f32 %v900, %v903
      %v907 = vadd.f32 %v901, %v904
      %v908 = vmul.f32 %v869, %v571
      %v909 = vmul.f32 %v870, %v571
      %v910 = vmul.f32 %v871, %v571
      %v911 = vadd.f32 %v905, %v908
      %v912 = vadd.f32 %v906, %v909
      %v913 = vadd.f32 %v907, %v910
      %v917 = vrot.slane %v911, 1
      %v918 = vrot.slane %v912, 1
      %v919 = vsel %vm626, %v917, %v918
      %v920 = vrot.slane %v913, 1
      %v921 = vsel %vm626, %v918, %v920
      %v924 = vadd.f32 %v885, %v919
      %v925 = vadd.f32 %v886, %v921
      %v926 = vmul.f32 %v413, %v509
      %v927 = vmul.f32 %v414, %v509
      %v928 = vmul.f32 %v415, %v509
      %v929 = vmul.f32 %v869, %v531
      %v930 = vmul.f32 %v870, %v531
      %v931 = vmul.f32 %v871, %v531
      %v932 = vadd.f32 %v926, %v929
      %v933 = vadd.f32 %v927, %v930
      %v934 = vadd.f32 %v928, %v931
      %v935 = vmul.f32 %v872, %v571
      %v936 = vmul.f32 %v873, %v571
      %v937 = vmul.f32 %v874, %v571
      %v938 = vadd.f32 %v932, %v935
      %v939 = vadd.f32 %v933, %v936
      %v940 = vadd.f32 %v934, %v937
      %v944 = vrot.slane %v938, 1
      %v945 = vrot.slane %v939, 1
      %v946 = vsel %vm626, %v944, %v945
      %v947 = vrot.slane %v940, 1
      %v948 = vsel %vm626, %v945, %v947
      %v951 = vadd.f32 %v897, %v946
      %v952 = vadd.f32 %v898, %v948
      %v953 = vmul.f32 %v410, %v684
      %v954 = vmul.f32 %v411, %v684
      %v955 = vmul.f32 %v412, %v684
      %v956 = vmul.f32 %v413, %v706
      %v957 = vmul.f32 %v414, %v706
      %v958 = vmul.f32 %v415, %v706
      %v959 = vadd.f32 %v953, %v956
      %v960 = vadd.f32 %v954, %v957
      %v961 = vadd.f32 %v955, %v958
      %v962 = vmul.f32 %v869, %v746
      %v963 = vmul.f32 %v870, %v746
      %v964 = vmul.f32 %v871, %v746
      %v965 = vadd.f32 %v959, %v962
      %v966 = vadd.f32 %v960, %v963
      %v967 = vadd.f32 %v961, %v964
      %v971 = vrot.slane %v965, 2
      %v972 = vrot.slane %v966, 2
      %v973 = vsel %vm801, %v971, %v972
      %v974 = vrot.slane %v967, 2
      %v975 = vsel %vm801, %v972, %v974
      %v978 = vadd.f32 %v924, %v973
      %v979 = vadd.f32 %v925, %v975
      %v980 = vmul.f32 %v413, %v684
      %v981 = vmul.f32 %v414, %v684
      %v982 = vmul.f32 %v415, %v684
      %v983 = vmul.f32 %v869, %v706
      %v984 = vmul.f32 %v870, %v706
      %v985 = vmul.f32 %v871, %v706
      %v986 = vadd.f32 %v980, %v983
      %v987 = vadd.f32 %v981, %v984
      %v988 = vadd.f32 %v982, %v985
      %v989 = vmul.f32 %v872, %v746
      %v990 = vmul.f32 %v873, %v746
      %v991 = vmul.f32 %v874, %v746
      %v992 = vadd.f32 %v986, %v989
      %v993 = vadd.f32 %v987, %v990
      %v994 = vadd.f32 %v988, %v991
      %v998 = vrot.slane %v992, 2
      %v999 = vrot.slane %v993, 2
      %v1000 = vsel %vm801, %v998, %v999
      %v1001 = vrot.slane %v994, 2
      %v1002 = vsel %vm801, %v999, %v1001
      %v1005 = vadd.f32 %v951, %v1000
      %v1006 = vadd.f32 %v952, %v1002
      %s1007 = scalar_lea.vmem %s386, 96
      %1008 = vst.msk [vmem:[%s1007] sm:$0xff] %vm856, %v978
      %1009 = vst.msk [vmem:[%s1007 + $0x8] sm:$0xff] %vm856, %v979
      %s1010 = scalar_lea.vmem %s386, 112
      %1011 = vst.msk [vmem:[%s1010] sm:$0xff] %vm856, %v1005
      %1012 = vst.msk [vmem:[%s1010 + $0x8] sm:$0xff] %vm856, %v1006
      %s1013 = smul.u32 8, %s22
      %p1014 = scmp.lt.s32.totalorder %s20, 1
      %s1015 = scalar_select %p1014, %s20, 1
      %p1016 = scmp.lt.s32.totalorder %s1013, 15
      %s1017 = scalar_select %p1016, %s1013, 15
      %p1018 = scmp.lt.s32.totalorder %s21, 0
      %s1019 = scalar_select %p1018, %s21, 0
      %s1020 = smul.addr %s1017, 2
      %s1021 = sadd.s32 %s1019, %s1020
      %s1022 = smul.addr %s1015, 32
      %s1023 = sadd.s32 %s1021, %s1022
      %s1024 = smul.addr %s1023, 8
      %s1025 = scalar_lea.vmem %s4, %s1024
      // Predicated region
      $region37: #{tpu_custom_call.1} parent=35 // pred_check
        %p1026 = pneg %p172
      $region38: #{tpu_custom_call.1} parent=35 // pred_check_branch
        %1028 = sbr.rel (%p1026) target = $region40
      $region39: #{tpu_custom_call.1} parent=35 // pred_region
        %s1029 = smul.u32 8, %s22
      $region40: #{tpu_custom_call.1} parent=35 // pred_fallthru
        _
    $region36: #{tpu_custom_call.1} parent=5 // pred_fallthru
      _
    %p1030 = scmp.le.s32.totalorder 2, %s10
    // Predicated region
    $region41: #{tpu_custom_call.1} parent=5 // pred_check
      %p1031 = pneg %p1030
    $region42: #{tpu_custom_call.1} parent=5 // pred_check_branch
      %1033 = sbr.rel (%p1031) target = $region44
    $region43: #{tpu_custom_call.1} parent=5 // pred_region
      %s1034 = ssub.s32 %s10, 2
      // Predicated region
      $region45: #{tpu_custom_call.1} parent=43 // pred_check
        %p1035 = pneg %p178
      $region46: #{tpu_custom_call.1} parent=43 // pred_check_branch
        %1037 = sbr.rel (%p1035) target = $region48
      $region47: #{tpu_custom_call.1} parent=43 // pred_region
        %s1038 = smul.u32 8, %s25
        %p1039 = scmp.lt.s32.totalorder %s23, 1
        %s1040 = scalar_select %p1039, %s23, 1
        %p1041 = scmp.lt.s32.totalorder %s1038, 15
        %s1042 = scalar_select %p1041, %s1038, 15
        %p1043 = scmp.lt.s32.totalorder %s24, 0
        %s1044 = scalar_select %p1043, %s24, 0
        %s1045 = smul.addr %s1042, 2
        %s1046 = sadd.s32 %s1044, %s1045
        %s1047 = smul.addr %s1040, 32
        %s1048 = sadd.s32 %s1046, %s1047
        %s1049 = smul.addr %s1048, 8
        %s1050 = scalar_lea.vmem %s4, %s1049
      $region48: #{tpu_custom_call.1} parent=43 // pred_fallthru
        _
    $region44: #{tpu_custom_call.1} parent=5 // pred_fallthru
      _
  $region6: #{tpu_custom_call.1} parent=0 // loop_footer
    %s14 = sadd.s32 1, %s10
  $region7: #{tpu_custom_call.1} parent=0 // loop_footer_branch
    %9 = sbr.rel target = $region3
  $region8: #{tpu_custom_call.1} parent=0 // loop_exit
    _

</llo_original>
